<compile_context>
chip_gen: v7x
topology: tpu7x:2x2x1
jax: 0.10.0
libtpu: 0.0.40
codegen_flags: <defaults>
</compile_context>

<pallas_src>
import jax
import jax.numpy as jnp
from jax.experimental import pallas as pl
from jax.experimental.pallas import tpu as pltpu


def linear_kernel(wb_ref, x_ref, o_ref):
    """y^T = W^T @ x^T + b, batch on lanes.

    wb_ref : SMEM (IN+1, OUT) scalars, last row is the bias.
    x_ref  : VMEM (IN, TB)   -- batch on the lane axis.
    o_ref  : VMEM (OUT, TB).
    """
    in_features = x_ref.shape[0]
    out_features = o_ref.shape[0]

    x = x_ref[...]                                    # (IN, TB) f32
    # Hoist the per-k sublane slices once; reuse across all output rows.
    xs = [x[k:k + 1, :] for k in range(in_features)]

    for j in range(out_features):
        # bias init + IN scalar*vector FMAs on the VPU (scalars splat from SMEM)
        acc = xs[0] * wb_ref[0, j] + wb_ref[in_features, j]
        for k in range(1, in_features):
            acc = acc + xs[k] * wb_ref[k, j]
        o_ref[j:j + 1, :] = acc                       # full-lane store, row j


def linear_forward(x, weight, bias, *, block_b=32768):
    """x: [B, IN] f32, weight: [IN, OUT] f32, bias: [OUT] f32 -> [B, OUT] f32."""
    B, IN = x.shape
    OUT = weight.shape[1]

    # Fuse weight + bias into one small scalar table [IN+1, OUT] (SMEM-resident).
    wb = jnp.concatenate([weight, bias[None, :]], axis=0).astype(jnp.float32)

    # Batch on the lane axis: stream x^T tiles of shape (IN, TB).
    xT = x.astype(jnp.float32).T                      # [IN, B]; 16 B/row, cheap

    if B <= 128:
        # Single tile equal to the full array dims -- no padding, no 128 rule.
        TB, B_pad = B, B
    else:
        # Lane-axis tile: multiple of 128, large enough to amortize step overhead.
        TB = max(128, (min(block_b, B) // 128) * 128)
        B_pad = pl.cdiv(B, TB) * TB
        # Keep >= 2 grid steps so both v7x TensorCores get work (no-op on v5e/v6e).
        if B_pad // TB < 2:
            TB = max(128, ((B_pad // 2) // 128) * 128)
            B_pad = pl.cdiv(B, TB) * TB
    if B_pad != B:
        xT = jnp.pad(xT, ((0, 0), (0, B_pad - B)))    # tail-only pad, tiny rows

    yT = pl.pallas_call(
        linear_kernel,
        out_shape=jax.ShapeDtypeStruct((OUT, B_pad), jnp.float32),
        grid_spec=pltpu.PrefetchScalarGridSpec(
            num_scalar_prefetch=0,
            grid=(B_pad // TB,),
            in_specs=[
                # Parameters: whole (IN+1, OUT) table resident in SMEM.
                pl.BlockSpec(memory_space=pltpu.MemorySpace.SMEM),
                # Activations: batch-on-lanes tiles stream through VMEM.
                pl.BlockSpec((IN, TB), lambda i: (0, i)),
            ],
            out_specs=pl.BlockSpec((OUT, TB), lambda i: (0, i)),
        ),
        compiler_params=pltpu.CompilerParams(
            dimension_semantics=("parallel",),        # batch axis is independent
        ),
    )(wb, xT)

    return yT[:, :B].T                                # [B, OUT]


if __name__ == "__main__":
    key = jax.random.PRNGKey(0)
    k_x, k_w, k_b = jax.random.split(key, 3)

    B, IN, OUT = 8, 4, 3

    # Deterministic parameter init mimicking nn.Linear's U(-1/sqrt(in), 1/sqrt(in)).
    bound = 1.0 / (IN ** 0.5)
    weight = jax.random.uniform(k_w, (IN, OUT), jnp.float32, -bound, bound)
    bias = jax.random.uniform(k_b, (OUT,), jnp.float32, -bound, bound)

    x = jax.random.normal(k_x, (B, IN), jnp.float32)

    fwd = jax.jit(linear_forward)
    out = jax.block_until_ready(fwd(x, weight, bias))

    # Correctness check against plain-JAX reference.
    ref = x @ weight + bias
    assert out.shape == (B, OUT)
    assert jnp.allclose(out, ref, atol=1e-5, rtol=1e-5), "mismatch vs reference"

    print("KERNEL_OK")
</pallas_src>

<mosaic_0001>
module attributes {stable_mosaic.version = 11 : i64} {
  func.func @linear_kernel(%arg0: i32, %arg1: memref<5x3xf32, #tpu.memory_space<smem>>, %arg2: memref<4x8xf32, #tpu.memory_space<vmem>>, %arg3: memref<3x8xf32, #tpu.memory_space<vmem>>) attributes {dimension_semantics = [#tpu.dimension_semantics<parallel>], iteration_bounds = array<i64: 1>, scalar_prefetch = 0 : i64, scratch_operands = 0 : i64, tpu.core_type = #tpu.core_type<tc>, window_params = [{transform_indices = @transform_0, window_bounds = array<i64: 5, 3>}, {transform_indices = @transform_1, window_bounds = array<i64: 4, 8>}, {transform_indices = @transform_2, window_bounds = array<i64: 3, 8>}]} {
    %c0 = arith.constant 0 : index
    %c0_0 = arith.constant 0 : index
    %0 = vector.load %arg2[%c0, %c0_0] : memref<4x8xf32, #tpu.memory_space<vmem>>, vector<4x8xf32>
    %1 = vector.extract_strided_slice %0 {offsets = [0, 0], sizes = [1, 8], strides = [1, 1]} : vector<4x8xf32> to vector<1x8xf32>
    %2 = vector.extract_strided_slice %0 {offsets = [1, 0], sizes = [1, 8], strides = [1, 1]} : vector<4x8xf32> to vector<1x8xf32>
    %3 = vector.extract_strided_slice %0 {offsets = [2, 0], sizes = [1, 8], strides = [1, 1]} : vector<4x8xf32> to vector<1x8xf32>
    %4 = vector.extract_strided_slice %0 {offsets = [3, 0], sizes = [1, 8], strides = [1, 1]} : vector<4x8xf32> to vector<1x8xf32>
    %c0_1 = arith.constant 0 : index
    %c0_2 = arith.constant 0 : index
    %5 = memref.load %arg1[%c0_1, %c0_2] : memref<5x3xf32, #tpu.memory_space<smem>>
    %6 = vector.broadcast %5 : f32 to vector<1x8xf32>
    %7 = arith.mulf %1, %6 : vector<1x8xf32>
    %c4 = arith.constant 4 : index
    %c0_3 = arith.constant 0 : index
    %8 = memref.load %arg1[%c4, %c0_3] : memref<5x3xf32, #tpu.memory_space<smem>>
    %9 = vector.broadcast %8 : f32 to vector<1x8xf32>
    %10 = arith.addf %7, %9 : vector<1x8xf32>
    %c1 = arith.constant 1 : index
    %c0_4 = arith.constant 0 : index
    %11 = memref.load %arg1[%c1, %c0_4] : memref<5x3xf32, #tpu.memory_space<smem>>
    %12 = vector.broadcast %11 : f32 to vector<1x8xf32>
    %13 = arith.mulf %2, %12 : vector<1x8xf32>
    %14 = arith.addf %10, %13 : vector<1x8xf32>
    %c2 = arith.constant 2 : index
    %c0_5 = arith.constant 0 : index
    %15 = memref.load %arg1[%c2, %c0_5] : memref<5x3xf32, #tpu.memory_space<smem>>
    %16 = vector.broadcast %15 : f32 to vector<1x8xf32>
    %17 = arith.mulf %3, %16 : vector<1x8xf32>
    %18 = arith.addf %14, %17 : vector<1x8xf32>
    %c3 = arith.constant 3 : index
    %c0_6 = arith.constant 0 : index
    %19 = memref.load %arg1[%c3, %c0_6] : memref<5x3xf32, #tpu.memory_space<smem>>
    %20 = vector.broadcast %19 : f32 to vector<1x8xf32>
    %21 = arith.mulf %4, %20 : vector<1x8xf32>
    %22 = arith.addf %18, %21 : vector<1x8xf32>
    %c0_7 = arith.constant 0 : index
    %c0_8 = arith.constant 0 : index
    %23 = vector.load %arg3[%c0_7, %c0_8] : memref<3x8xf32, #tpu.memory_space<vmem>>, vector<1x8xf32>
    tpu.vector_store %arg3[%c0_7, %c0_8], %22 {strides = array<i32>} : memref<3x8xf32, #tpu.memory_space<vmem>>, vector<1x8xf32>,
    %c0_9 = arith.constant 0 : index
    %c1_10 = arith.constant 1 : index
    %24 = memref.load %arg1[%c0_9, %c1_10] : memref<5x3xf32, #tpu.memory_space<smem>>
    %25 = vector.broadcast %24 : f32 to vector<1x8xf32>
    %26 = arith.mulf %1, %25 : vector<1x8xf32>
    %c4_11 = arith.constant 4 : index
    %c1_12 = arith.constant 1 : index
    %27 = memref.load %arg1[%c4_11, %c1_12] : memref<5x3xf32, #tpu.memory_space<smem>>
    %28 = vector.broadcast %27 : f32 to vector<1x8xf32>
    %29 = arith.addf %26, %28 : vector<1x8xf32>
    %c1_13 = arith.constant 1 : index
    %c1_14 = arith.constant 1 : index
    %30 = memref.load %arg1[%c1_13, %c1_14] : memref<5x3xf32, #tpu.memory_space<smem>>
    %31 = vector.broadcast %30 : f32 to vector<1x8xf32>
    %32 = arith.mulf %2, %31 : vector<1x8xf32>
    %33 = arith.addf %29, %32 : vector<1x8xf32>
    %c2_15 = arith.constant 2 : index
    %c1_16 = arith.constant 1 : index
    %34 = memref.load %arg1[%c2_15, %c1_16] : memref<5x3xf32, #tpu.memory_space<smem>>
    %35 = vector.broadcast %34 : f32 to vector<1x8xf32>
    %36 = arith.mulf %3, %35 : vector<1x8xf32>
    %37 = arith.addf %33, %36 : vector<1x8xf32>
    %c3_17 = arith.constant 3 : index
    %c1_18 = arith.constant 1 : index
    %38 = memref.load %arg1[%c3_17, %c1_18] : memref<5x3xf32, #tpu.memory_space<smem>>
    %39 = vector.broadcast %38 : f32 to vector<1x8xf32>
    %40 = arith.mulf %4, %39 : vector<1x8xf32>
    %41 = arith.addf %37, %40 : vector<1x8xf32>
    %c1_19 = arith.constant 1 : index
    %c0_20 = arith.constant 0 : index
    %42 = vector.load %arg3[%c1_19, %c0_20] : memref<3x8xf32, #tpu.memory_space<vmem>>, vector<1x8xf32>
    tpu.vector_store %arg3[%c1_19, %c0_20], %41 {strides = array<i32>} : memref<3x8xf32, #tpu.memory_space<vmem>>, vector<1x8xf32>,
    %c0_21 = arith.constant 0 : index
    %c2_22 = arith.constant 2 : index
    %43 = memref.load %arg1[%c0_21, %c2_22] : memref<5x3xf32, #tpu.memory_space<smem>>
    %44 = vector.broadcast %43 : f32 to vector<1x8xf32>
    %45 = arith.mulf %1, %44 : vector<1x8xf32>
    %c4_23 = arith.constant 4 : index
    %c2_24 = arith.constant 2 : index
    %46 = memref.load %arg1[%c4_23, %c2_24] : memref<5x3xf32, #tpu.memory_space<smem>>
    %47 = vector.broadcast %46 : f32 to vector<1x8xf32>
    %48 = arith.addf %45, %47 : vector<1x8xf32>
    %c1_25 = arith.constant 1 : index
    %c2_26 = arith.constant 2 : index
    %49 = memref.load %arg1[%c1_25, %c2_26] : memref<5x3xf32, #tpu.memory_space<smem>>
    %50 = vector.broadcast %49 : f32 to vector<1x8xf32>
    %51 = arith.mulf %2, %50 : vector<1x8xf32>
    %52 = arith.addf %48, %51 : vector<1x8xf32>
    %c2_27 = arith.constant 2 : index
    %c2_28 = arith.constant 2 : index
    %53 = memref.load %arg1[%c2_27, %c2_28] : memref<5x3xf32, #tpu.memory_space<smem>>
    %54 = vector.broadcast %53 : f32 to vector<1x8xf32>
    %55 = arith.mulf %3, %54 : vector<1x8xf32>
    %56 = arith.addf %52, %55 : vector<1x8xf32>
    %c3_29 = arith.constant 3 : index
    %c2_30 = arith.constant 2 : index
    %57 = memref.load %arg1[%c3_29, %c2_30] : memref<5x3xf32, #tpu.memory_space<smem>>
    %58 = vector.broadcast %57 : f32 to vector<1x8xf32>
    %59 = arith.mulf %4, %58 : vector<1x8xf32>
    %60 = arith.addf %56, %59 : vector<1x8xf32>
    %c2_31 = arith.constant 2 : index
    %c0_32 = arith.constant 0 : index
    %61 = vector.load %arg3[%c2_31, %c0_32] : memref<3x8xf32, #tpu.memory_space<vmem>>, vector<1x8xf32>
    tpu.vector_store %arg3[%c2_31, %c0_32], %60 {strides = array<i32>} : memref<3x8xf32, #tpu.memory_space<vmem>>, vector<1x8xf32>,
    return
  }
  func.func @transform_0(%arg0: i32) -> (i32, i32) {
    %c0_i32 = arith.constant 0 : i32
    %c0_i32_0 = arith.constant 0 : i32
    %c0_i32_1 = arith.constant 0 : i32
    return %c0_i32, %c0_i32_0 : i32, i32
  }
  func.func @transform_1(%arg0: i32) -> (i32, i32) {
    %c0_i32 = arith.constant 0 : i32
    %c0_i32_0 = arith.constant 0 : i32
    return %c0_i32, %arg0 : i32, i32
  }
  func.func @transform_2(%arg0: i32) -> (i32, i32) {
    %c0_i32 = arith.constant 0 : i32
    %c0_i32_0 = arith.constant 0 : i32
    return %c0_i32, %arg0 : i32, i32
  }
}

</mosaic_0001>

<llo_original>
// kernel: linear_forward.1
$region0: #{linear_forward.1}
  #allocation0 [shape = 'u32[]', space=smem, size = 0x4, offset = 0x4, fixed_abs, tag = 'smem constant byte address 0x4 - core index']
  #allocation1 [shape = 'u32[144,128]{1,0:T(1,128)}', space=vmem, size = 0x12000, scoped, tag = 'internal scratch']
  %s0 = inlined_call_operand.vmem [shape: f32[5,3], index: 0, kind: input, shape index: {}]
  %s1 = inlined_call_operand.vmem [shape: f32[4,8], index: 1, kind: input, shape index: {}]
  %s2 = inlined_call_operand.hbm [shape: f32[3,8], index: 2, kind: output, shape index: {}]
  %s3 = sld [smem:[#allocation0]]
  $region22: #{linear_forward.1} parent=0
    _
  %s5 = ssub.s32 1, %s3
  %s6 = scalar_select 0, %s5, %s3
  $region1: #{linear_forward.1} parent=0
    #allocation2 [shape = 'u8[4096]{0}', space=smem, size = 0x1000, scoped, tag = 'input window, operand 0, single buffered']
    #allocation3 [shape = 's32[1]{0}', space=sflag, size = 0x4, scoped, tag = 'scoped memory for linear_forward.1']
    #allocation4 [shape = 's32[1]{0}', space=sflag, size = 0x4, scoped, tag = 'scoped memory for linear_forward.1']
    #allocation5 [shape = 'u8[2048]{0}', space=vmem, size = 0x800, scoped, tag = 'output window, operand 0, single buffered']
    %7 = vsyncpa [#allocation4], 0
    %8 = vsyncpa [#allocation3], 0
    // Predicated region
    $region2: #{linear_forward.1} parent=1 // pred_check
      _
    $region3: #{linear_forward.1} parent=1 // pred_check_branch
      %10 = sbr.rel (0) target = $region5
    $region4: #{linear_forward.1} parent=1 // pred_region
      %s12 = ssub.s32 128, 128
      %13 = vsyncadd [#allocation4], %s12
      %s15 = sshll.u32 %s0, 4
      %s16 = int_to_ptr.vmem [resolvable:$true] %s15
      %18 = dma.vmem_to_smem %s16, 128, [#allocation2], [#allocation4]
    $region5: #{linear_forward.1} parent=1 // pred_fallthru
      _
    // Predicated region
    $region6: #{linear_forward.1} parent=1 // pred_check
      _
    $region7: #{linear_forward.1} parent=1 // pred_check_branch
      %20 = sbr.rel (0) target = $region9
    $region8: #{linear_forward.1} parent=1 // pred_region
      _
    $region9: #{linear_forward.1} parent=1 // pred_fallthru
      _
    // Predicated region
    $region10: #{linear_forward.1} parent=1 // pred_check
      _
    $region11: #{linear_forward.1} parent=1 // pred_check_branch
      %22 = sbr.rel (0) target = $region13
    $region12: #{linear_forward.1} parent=1 // pred_region
      %23 = dma.done [#allocation4], 128
    $region13: #{linear_forward.1} parent=1 // pred_fallthru
      _
    %24 = sfence
    %v25 = vld [vmem:[%s1] sm:$0xf]
    %s26 = sld [smem:[#allocation2]]
    %v27 = vstv %s26
    %v28 = vmul.f32 %v25, %v27
    %s29 = sld [smem:[#allocation2 + $0x200]]
    %v30 = vstv %s29
    %v31 = vadd.f32 %v28, %v30
    %s32 = sld [smem:[#allocation2 + $0x80]]
    %v33 = vstv %s32
    %v34 = vmul.f32 %v25, %v33
    %v36 = vrot.slane %v34, 1
    %v38 = vadd.f32 %v31, %v36
    %s39 = sld [smem:[#allocation2 + $0x100]]
    %v40 = vstv %s39
    %v41 = vmul.f32 %v25, %v40
    %v43 = vrot.slane %v41, 2
    %v45 = vadd.f32 %v38, %v43
    %s46 = sld [smem:[#allocation2 + $0x180]]
    %v47 = vstv %s46
    %v48 = vmul.f32 %v25, %v47
    %v50 = vrot.slane %v48, 3
    %v52 = vadd.f32 %v45, %v50
    %vm53 = vcmask 57344
    %54 = vst.msk [vmem:[#allocation5] sm:$0x1] %vm53, %v52
    %s55 = sld [smem:[#allocation2 + $0x1]]
    %v56 = vstv %s55
    %v57 = vmul.f32 %v25, %v56
    %s58 = sld [smem:[#allocation2 + $0x201]]
    %v59 = vstv %s58
    %v60 = vadd.f32 %v57, %v59
    %s61 = sld [smem:[#allocation2 + $0x81]]
    %v62 = vstv %s61
    %v63 = vmul.f32 %v25, %v62
    %v65 = vrot.slane %v63, 1
    %v67 = vadd.f32 %v60, %v65
    %s68 = sld [smem:[#allocation2 + $0x101]]
    %v69 = vstv %s68
    %v70 = vmul.f32 %v25, %v69
    %v72 = vrot.slane %v70, 2
    %v74 = vadd.f32 %v67, %v72
    %s75 = sld [smem:[#allocation2 + $0x181]]
    %v76 = vstv %s75
    %v77 = vmul.f32 %v25, %v76
    %v79 = vrot.slane %v77, 3
    %v81 = vadd.f32 %v74, %v79
    %82 = vst.msk [vmem:[#allocation5 + $0x1] sm:$0x1] %vm53, %v81
    %s83 = sld [smem:[#allocation2 + $0x2]]
    %v84 = vstv %s83
    %v85 = vmul.f32 %v25, %v84
    %s86 = sld [smem:[#allocation2 + $0x202]]
    %v87 = vstv %s86
    %v88 = vadd.f32 %v85, %v87
    %s89 = sld [smem:[#allocation2 + $0x82]]
    %v90 = vstv %s89
    %v91 = vmul.f32 %v25, %v90
    %v93 = vrot.slane %v91, 1
    %v95 = vadd.f32 %v88, %v93
    %s96 = sld [smem:[#allocation2 + $0x102]]
    %v97 = vstv %s96
    %v98 = vmul.f32 %v25, %v97
    %v100 = vrot.slane %v98, 2
    %v102 = vadd.f32 %v95, %v100
    %s103 = sld [smem:[#allocation2 + $0x182]]
    %v104 = vstv %s103
    %v105 = vmul.f32 %v25, %v104
    %v107 = vrot.slane %v105, 3
    %v109 = vadd.f32 %v102, %v107
    %110 = vst.msk [vmem:[#allocation5 + $0x2] sm:$0x1] %vm53, %v109
    // Predicated region
    $region14: #{linear_forward.1} parent=1 // pred_check
      _
    $region15: #{linear_forward.1} parent=1 // pred_check_branch
      %112 = sbr.rel (0) target = $region17
    $region16: #{linear_forward.1} parent=1 // pred_region
      %s114 = ssub.s32 64, 64
      %115 = vsyncadd [#allocation3], %s114
      %s117 = sshll.u32 [#allocation5], 4
      %s118 = int_to_ptr.vmem [resolvable:$true] %s117
      %120 = dma.vmem_to_hbm [thread:$0]  %s118, 64, %s2, [#allocation3]
    $region17: #{linear_forward.1} parent=1 // pred_fallthru
      _
    // Predicated region
    $region18: #{linear_forward.1} parent=1 // pred_check
      _
    $region19: #{linear_forward.1} parent=1 // pred_check_branch
      %122 = sbr.rel (0) target = $region21
    $region20: #{linear_forward.1} parent=1 // pred_region
      %123 = dma.done [#allocation3], 64
    $region21: #{linear_forward.1} parent=1 // pred_fallthru
      _
    %124 = vsyncpa [#allocation3], 1
    %125 = vsyncpa [#allocation4], 1

</llo_original>
